<compile_context>
chip_gen: v7x
topology: tpu7x:2x2x1
jax: 0.10.0
libtpu: 0.0.40
codegen_flags: <defaults>
</compile_context>

<pallas_src>
import functools

import jax
import jax.numpy as jnp
from jax.experimental import pallas as pl
from jax.experimental.pallas import tpu as pltpu


def _round_up(x, m):
    return (x + m - 1) // m * m


# ----------------------------------------------------------------------------
# Pallas kernels
# ----------------------------------------------------------------------------
def _matmul_kernel(x_ref, w_ref, b_ref, o_ref, *scratch, relu, fuse_softmax,
                   n_valid, k_steps):
    """Tiled matmul, fp32 accumulation, fused bias + ReLU (+ optional softmax)."""

    def epilogue(acc):
        out = acc + b_ref[...]
        if relu:
            out = jnp.maximum(out, 0.0)
        if fuse_softmax:
            # The whole (padded) class row lives in this tile; mask padded
            # columns so they contribute nothing to the normalization.
            col = jax.lax.broadcasted_iota(jnp.int32, out.shape, 1)
            out = jnp.where(col < n_valid, out, -jnp.inf)
            m = jnp.max(out, axis=-1, keepdims=True)
            e = jnp.exp(out - m)
            denom = jnp.sum(e, axis=-1, keepdims=True)
            out = e * pl.reciprocal(denom, approx=True)
        return out.astype(o_ref.dtype)

    if k_steps == 1:
        # Single K step (all conv matmuls): no accumulator scratch, no
        # zero-init / read-modify-write / copy-out of a VMEM accumulator.
        o_ref[...] = epilogue(
            jnp.dot(x_ref[...], w_ref[...], preferred_element_type=jnp.float32))
    else:
        acc_ref = scratch[0]

        @pl.when(pl.program_id(2) == 0)
        def _():
            acc_ref[...] = jnp.zeros_like(acc_ref)

        acc_ref[...] += jnp.dot(x_ref[...], w_ref[...],
                                preferred_element_type=jnp.float32)

        @pl.when(pl.program_id(2) == k_steps - 1)
        def _():
            o_ref[...] = epilogue(acc_ref[...])


def _maxpool_kernel(x_ref, o_ref, hbuf_ref, vbuf_ref, *, k, s):
    """Separable k x k / stride-s max pool.

    k contiguous shifted reads along W (row max), k contiguous shifted reads
    along H (window max), then a single strided subsample for the output.
    """
    H, W, _ = x_ref.shape
    Ho, Wo, _ = o_ref.shape
    Wc = W - k + 1
    Hc = H - k + 1

    # Horizontal pass: contiguous shifted reads of the resident input block.
    hmax = x_ref[:, pl.ds(0, Wc), :]
    for dx in range(1, k):
        hmax = jnp.maximum(hmax, x_ref[:, pl.ds(dx, Wc), :])
    hbuf_ref[...] = hmax

    # Vertical pass: contiguous shifted reads along H of the row-max buffer.
    vmax = hbuf_ref[pl.ds(0, Hc), :, :]
    for dy in range(1, k):
        vmax = jnp.maximum(vmax, hbuf_ref[pl.ds(dy, Hc), :, :])
    vbuf_ref[...] = vmax

    # One strided subsample of the fully reduced window-max field.
    o_ref[...] = vbuf_ref[pl.ds(0, Ho, stride=s), pl.ds(0, Wo, stride=s), :]


# ----------------------------------------------------------------------------
# Wrappers around pallas_call
# ----------------------------------------------------------------------------
def matmul_bias(x, w_p, b_p, *, n_valid, relu=False, fuse_softmax=False,
                tm=None, tk=None, tn=None):
    """y = x @ w_p + b_p (optionally ReLU / row-softmax).

    x:   [M, K]   activations (fp32), padded in here.
    w_p: [Kp, Np] pre-padded weight (fp32 for convs, bf16 for FC layers).
    b_p: [1, Np]  pre-padded bias (fp32).
    """
    M, K = x.shape
    Kp, Np = w_p.shape
    assert K <= Kp and n_valid <= Np

    compute_dtype = w_p.dtype
    m_align = 16 if compute_dtype == jnp.bfloat16 else 8

    if tm is None:
        tm = 256 if M >= 1024 else 128     # 256x256 output tiles feed the 256^2 MXU
    tm = min(tm, _round_up(M, m_align))
    if tk is None:
        tk = min(Kp, 3584)                 # conv-sized K: a single K step
    if tn is None:
        tn = Np                            # conv-sized N: a single N block
    assert Kp % tk == 0 and Np % tn == 0

    Mp = _round_up(M, tm)
    k_steps = Kp // tk
    if fuse_softmax:
        assert Np == tn, "fused softmax needs the whole class row in one tile"

    xp = jnp.pad(x, ((0, Mp - M), (0, Kp - K))).astype(compute_dtype)

    scratch = [pltpu.VMEM((tm, tn), jnp.float32)] if k_steps > 1 else []

    out = pl.pallas_call(
        functools.partial(_matmul_kernel, relu=relu, fuse_softmax=fuse_softmax,
                          n_valid=n_valid, k_steps=k_steps),
        out_shape=jax.ShapeDtypeStruct((Mp, Np), jnp.float32),
        grid_spec=pltpu.PrefetchScalarGridSpec(
            num_scalar_prefetch=0,
            grid=(Mp // tm, Np // tn, k_steps),
            in_specs=[
                pl.BlockSpec((tm, tk), lambda i, j, k: (i, k)),
                pl.BlockSpec((tk, tn), lambda i, j, k: (k, j)),
                pl.BlockSpec((1, tn), lambda i, j, k: (0, j)),
            ],
            out_specs=pl.BlockSpec((tm, tn), lambda i, j, k: (i, j)),
            scratch_shapes=scratch,
        ),
        compiler_params=pltpu.CompilerParams(
            dimension_semantics=("parallel", "parallel", "arbitrary"),
            # Peak here is ~19 MiB (FC1 bf16 weight blocks, double-buffered).
            # 32 MiB raises v5e's 16 MiB scoped default while leaving headroom
            # on v7x (64 MiB physical VMEM per TensorCore).
            vmem_limit_bytes=32 * 1024 * 1024,
        ),
    )(xp, w_p, b_p)

    if Mp == M and Np == n_valid:
        return out
    return out[:M, :n_valid]


def maxpool2d(x, k=3, s=2):
    """Max pool (NHWC, no padding). One grid step per image."""
    N, H, W, C = x.shape
    Ho = (H - k) // s + 1
    Wo = (W - k) // s + 1
    Wc = W - k + 1
    Hc = H - k + 1
    return pl.pallas_call(
        functools.partial(_maxpool_kernel, k=k, s=s),
        out_shape=jax.ShapeDtypeStruct((N, Ho, Wo, C), x.dtype),
        grid_spec=pltpu.PrefetchScalarGridSpec(
            num_scalar_prefetch=0,
            grid=(N,),
            in_specs=[pl.BlockSpec((None, H, W, C), lambda n: (n, 0, 0, 0))],
            out_specs=pl.BlockSpec((None, Ho, Wo, C), lambda n: (n, 0, 0, 0)),
            scratch_shapes=[pltpu.VMEM((H, Wc, C), x.dtype),
                            pltpu.VMEM((Hc, Wc, C), x.dtype)],
        ),
        compiler_params=pltpu.CompilerParams(
            dimension_semantics=("parallel",)
        ),
    )(x)


def conv2d_relu(x, w2d_p, b_p, *, kh, kw, cout, stride, pad, patches_op):
    """Conv2d + ReLU via im2col (glue) + Pallas matmul.

    x:     NHWC [N, H, W, Cin]
    w2d_p: [Kp, Np] pre-reordered / pre-padded 2-D weight (see prepare_params)
    b_p:   [1, Np]  pre-padded bias
    """
    N, H, W, _ = x.shape
    Ho = (H + 2 * pad - kh) // stride + 1
    Wo = (W + 2 * pad - kw) // stride + 1

    if patches_op:
        # Large kernel (11x11 conv1): one fused XLA patch-extraction op.
        # Feature order: input channel outer, filter position (row-major) inner.
        patches = jax.lax.conv_general_dilated_patches(
            x, (kh, kw), (stride, stride), [(pad, pad), (pad, pad)],
            dimension_numbers=("NHWC", "HWIO", "NHWC"))
    else:
        xp = jnp.pad(x, ((0, 0), (pad, pad), (pad, pad), (0, 0)))
        cols = [
            xp[:, dy:dy + stride * Ho:stride, dx:dx + stride * Wo:stride, :]
            for dy in range(kh)
            for dx in range(kw)
        ]
        patches = jnp.concatenate(cols, axis=-1)   # position outer, channel inner

    patches = patches.reshape(N * Ho * Wo, -1)
    y = matmul_bias(patches, w2d_p, b_p, n_valid=cout, relu=True)
    return y.reshape(N, Ho, Wo, cout)


# ----------------------------------------------------------------------------
# Parameters
# ----------------------------------------------------------------------------
_CONV_DEFS = {
    "c1": dict(kh=11, kw=11, cin=3,   cout=64,  stride=4, pad=2, patches_op=True),
    "c2": dict(kh=5,  kw=5,  cin=64,  cout=192, stride=1, pad=2, patches_op=False),
    "c3": dict(kh=3,  kw=3,  cin=192, cout=384, stride=1, pad=1, patches_op=False),
    "c4": dict(kh=3,  kw=3,  cin=384, cout=256, stride=1, pad=1, patches_op=False),
    "c5": dict(kh=3,  kw=3,  cin=256, cout=256, stride=1, pad=1, patches_op=False),
}


def _conv_w2d(w, patches_op):
    """Reorder [KH, KW, Cin, Cout] conv weight into the im2col 2-D layout."""
    kh, kw, cin, cout = w.shape
    if patches_op:
        # conv_general_dilated_patches: input-channel outer, position inner.
        return jnp.transpose(w, (2, 0, 1, 3)).reshape(cin * kh * kw, cout)
    # slice-based im2col: position outer, channel inner.
    return w.reshape(kh * kw * cin, cout)


def init_params(key, num_classes=1000):
    """Raw (PyTorch-layout-ish) parameters: conv HWIO, fc [in, out]; fp32."""
    keys = jax.random.split(key, 8)
    scale = 0.01

    def conv_w(k, kh, kw, cin, cout):
        return scale * jax.random.normal(k, (kh, kw, cin, cout), jnp.float32)

    def fc_w(k, din, dout):
        return scale * jax.random.normal(k, (din, dout), jnp.float32)

    return {
        "c1_w": conv_w(keys[0], 11, 11, 3, 64),   "c1_b": jnp.zeros((64,), jnp.float32),
        "c2_w": conv_w(keys[1], 5, 5, 64, 192),   "c2_b": jnp.zeros((192,), jnp.float32),
        "c3_w": conv_w(keys[2], 3, 3, 192, 384),  "c3_b": jnp.zeros((384,), jnp.float32),
        "c4_w": conv_w(keys[3], 3, 3, 384, 256),  "c4_b": jnp.zeros((256,), jnp.float32),
        "c5_w": conv_w(keys[4], 3, 3, 256, 256),  "c5_b": jnp.zeros((256,), jnp.float32),
        "f1_w": fc_w(keys[5], 256 * 6 * 6, 4096), "f1_b": jnp.zeros((4096,), jnp.float32),
        "f2_w": fc_w(keys[6], 4096, 4096),        "f2_b": jnp.zeros((4096,), jnp.float32),
        "f3_w": fc_w(keys[7], 4096, num_classes), "f3_b": jnp.zeros((num_classes,), jnp.float32),
    }


def prepare_params(params):
    """One-time prep (outside the per-call jitted path): reorder conv weights
    into im2col 2-D layout, pad K/N to tile multiples, store FC weights as
    bfloat16 so per-forward weight streaming is halved."""
    prep = {}
    for name, cfg in _CONV_DEFS.items():
        w2d = _conv_w2d(params[name + "_w"], cfg["patches_op"])
        b = params[name + "_b"]
        K, N = w2d.shape
        Kp, Np = _round_up(K, 128), _round_up(N, 128)
        prep[name + "_w"] = jnp.pad(w2d, ((0, Kp - K), (0, Np - N)))
        prep[name + "_b"] = jnp.pad(b.reshape(1, N), ((0, 0), (0, Np - N)))
    for name in ("f1", "f2", "f3"):
        w = params[name + "_w"]
        b = params[name + "_b"]
        K, N = w.shape
        Kp, Np = _round_up(K, 128), _round_up(N, 128)
        prep[name + "_w"] = jnp.pad(w, ((0, Kp - K), (0, Np - N))).astype(jnp.bfloat16)
        prep[name + "_b"] = jnp.pad(b.reshape(1, N), ((0, 0), (0, Np - N)))
    return prep


# ----------------------------------------------------------------------------
# Forward pass (mirrors AlexNet.forward, eval mode, no labels)
# ----------------------------------------------------------------------------
@functools.partial(jax.jit, static_argnames=("num_classes",))
def alexnet_forward(prep, x_nchw, *, num_classes=1000):
    # NCHW -> NHWC for the conv stack.
    x = jnp.transpose(x_nchw, (0, 2, 3, 1)).astype(jnp.float32)

    for name in ("c1", "c2", "c3", "c4", "c5"):
        cfg = _CONV_DEFS[name]
        x = conv2d_relu(x, prep[name + "_w"], prep[name + "_b"],
                        kh=cfg["kh"], kw=cfg["kw"], cout=cfg["cout"],
                        stride=cfg["stride"], pad=cfg["pad"],
                        patches_op=cfg["patches_op"])
        if name in ("c1", "c2", "c5"):
            x = maxpool2d(x, k=3, s=2)
    # conv stack output: [N, 6, 6, 256]

    # torch.flatten(x, 1) on NCHW -> flatten in (C, H, W) order.
    n = x.shape[0]
    x = jnp.transpose(x, (0, 3, 1, 2)).reshape(n, 256 * 6 * 6)

    # Classifier (Dropout == identity in eval mode). Weight-streaming bound at
    # small batch: bf16 weights + large K/N tiles keep DMAs in the multi-MiB
    # range with few grid steps.
    x = matmul_bias(x, prep["f1_w"], prep["f1_b"], n_valid=4096, relu=True,
                    tk=2304, tn=2048)                      # 9216 = 4 * 2304
    x = matmul_bias(x, prep["f2_w"], prep["f2_b"], n_valid=4096, relu=True,
                    tk=2048, tn=2048)                      # 4096 = 2 * 2048
    # FC3 + softmax fused in the matmul epilogue (whole class row in one tile).
    x = matmul_bias(x, prep["f3_w"], prep["f3_b"], n_valid=num_classes,
                    relu=False, fuse_softmax=True, tk=2048, tn=1024)
    return x


if __name__ == "__main__":
    key = jax.random.PRNGKey(0)
    pkey, xkey, ckey = jax.random.split(key, 3)

    # --- numeric check: patches-op conv path vs reference XLA conv ----------
    k1, k2, k3 = jax.random.split(ckey, 3)
    xc = jax.random.normal(k1, (1, 19, 19, 3), jnp.float32)
    wc = 0.1 * jax.random.normal(k2, (11, 11, 3, 64), jnp.float32)
    bc = 0.1 * jax.random.normal(k3, (64,), jnp.float32)
    w2d = _conv_w2d(wc, patches_op=True)
    Kc, Nc = w2d.shape
    Kcp, Ncp = _round_up(Kc, 128), _round_up(Nc, 128)
    w2d_p = jnp.pad(w2d, ((0, Kcp - Kc), (0, Ncp - Nc)))
    bc_p = jnp.pad(bc.reshape(1, Nc), ((0, 0), (0, Ncp - Nc)))
    y_pallas = conv2d_relu(xc, w2d_p, bc_p, kh=11, kw=11, cout=64,
                           stride=4, pad=2, patches_op=True)
    y_ref = jax.lax.conv_general_dilated(
        xc, wc, (4, 4), [(2, 2), (2, 2)],
        dimension_numbers=("NHWC", "HWIO", "NHWC"),
        precision=jax.lax.Precision.HIGHEST) + bc
    y_ref = jnp.maximum(y_ref, 0.0)
    assert float(jnp.max(jnp.abs(y_pallas - y_ref))) < 1e-3

    # --- full forward --------------------------------------------------------
    params = init_params(pkey, num_classes=1000)
    prep = prepare_params(params)
    # AlexNet's classifier (256*6*6) fixes the spatial size to 224x224;
    # keep batch small (for throughput, raise the batch so M per FC tile grows).
    x = jax.random.normal(xkey, (2, 3, 224, 224), jnp.float32)

    probs = alexnet_forward(prep, x, num_classes=1000)
    probs = jax.block_until_ready(probs)

    assert probs.shape == (2, 1000)
    assert bool(jnp.all(jnp.isfinite(probs)))
    # softmax rows must sum to ~1 (approx reciprocal -> slightly looser tol)
    assert bool(jnp.all(jnp.abs(jnp.sum(probs, axis=1) - 1.0) < 5e-3))

    print("KERNEL_OK")
</pallas_src>

<mosaic_0001>
module attributes {stable_mosaic.version = 11 : i64} {
  func.func @_matmul_kernel(%arg0: i32, %arg1: i32, %arg2: i32, %arg3: memref<16x384xf32, #tpu.memory_space<vmem>>, %arg4: memref<384x128xf32, #tpu.memory_space<vmem>>, %arg5: memref<1x128xf32, #tpu.memory_space<vmem>>, %arg6: memref<16x128xf32, #tpu.memory_space<vmem>>) attributes {dimension_semantics = [#tpu.dimension_semantics<parallel>, #tpu.dimension_semantics<parallel>, #tpu.dimension_semantics<arbitrary>], iteration_bounds = array<i64: 1, 1, 1>, scalar_prefetch = 0 : i64, scratch_operands = 0 : i64, tpu.core_type = #tpu.core_type<tc>, window_params = [{transform_indices = @transform_0, window_bounds = array<i64: 16, 384>}, {transform_indices = @transform_1, window_bounds = array<i64: 384, 128>}, {transform_indices = @transform_2, window_bounds = array<i64: 1, 128>}, {transform_indices = @transform_3, window_bounds = array<i64: 16, 128>}]} {
    %c0 = arith.constant 0 : index
    %c0_0 = arith.constant 0 : index
    %0 = vector.load %arg3[%c0, %c0_0] : memref<16x384xf32, #tpu.memory_space<vmem>>, vector<16x384xf32>
    %c0_1 = arith.constant 0 : index
    %c0_2 = arith.constant 0 : index
    %1 = vector.load %arg4[%c0_1, %c0_2] : memref<384x128xf32, #tpu.memory_space<vmem>>, vector<384x128xf32>
    %cst = arith.constant dense<0.000000e+00> : vector<16x128xf32>
    %2 = tpu.matmul %0, %1, %cst {dimension_numbers = #tpu.dot_dimension_numbers<[1], [0], [0], [1], [0, 0, 1, 1], [], []>} : vector<16x384xf32>, vector<384x128xf32>, vector<16x128xf32> -> vector<16x128xf32>
    %c0_3 = arith.constant 0 : index
    %c0_4 = arith.constant 0 : index
    %3 = vector.load %arg5[%c0_3, %c0_4] : memref<1x128xf32, #tpu.memory_space<vmem>>, vector<1x128xf32>
    %4 = vector.broadcast %3 : vector<1x128xf32> to vector<16x128xf32>
    %5 = arith.addf %2, %4 : vector<16x128xf32>
    %cst_5 = arith.constant 0.000000e+00 : f32
    %6 = vector.broadcast %cst_5 : f32 to vector<16x128xf32>
    %7 = arith.maximumf %5, %6 : vector<16x128xf32>
    %c0_6 = arith.constant 0 : index
    %c0_7 = arith.constant 0 : index
    %8 = vector.load %arg6[%c0_6, %c0_7] : memref<16x128xf32, #tpu.memory_space<vmem>>, vector<16x128xf32>
    tpu.vector_store %arg6[%c0_6, %c0_7], %7 {strides = array<i32>} : memref<16x128xf32, #tpu.memory_space<vmem>>, vector<16x128xf32>,
    return
  }
  func.func @transform_0(%arg0: i32, %arg1: i32, %arg2: i32) -> (i32, i32) {
    %c0_i32 = arith.constant 0 : i32
    return %arg0, %arg2 : i32, i32
  }
  func.func @transform_1(%arg0: i32, %arg1: i32, %arg2: i32) -> (i32, i32) {
    %c0_i32 = arith.constant 0 : i32
    return %arg2, %arg1 : i32, i32
  }
  func.func @transform_2(%arg0: i32, %arg1: i32, %arg2: i32) -> (i32, i32) {
    %c0_i32 = arith.constant 0 : i32
    %c0_i32_0 = arith.constant 0 : i32
    return %c0_i32, %arg1 : i32, i32
  }
  func.func @transform_3(%arg0: i32, %arg1: i32, %arg2: i32) -> (i32, i32) {
    %c0_i32 = arith.constant 0 : i32
    return %arg0, %arg1 : i32, i32
  }
}

</mosaic_0001>

<llo_original>
// kernel: tpu_custom_call.1
$region0: #{tpu_custom_call.1}
  #allocation0 [shape = 'u32[]', space=smem, size = 0x4, offset = 0x4, fixed_abs, tag = 'smem constant byte address 0x4 - core index']
  #allocation1 [shape = 'u32[144,128]{1,0:T(1,128)}', space=vmem, size = 0x12000, scoped, tag = 'internal scratch']
  %s0 = inlined_call_operand.hbm [shape: f32[16,384], index: 0, kind: input, shape index: {}]
  %s1 = inlined_call_operand.hbm [shape: f32[384,128], index: 1, kind: input, shape index: {}]
  %s2 = inlined_call_operand.vmem [shape: f32[1,128], index: 2, kind: input, shape index: {}]
  %s3 = inlined_call_operand.hbm [shape: f32[16,128], index: 3, kind: output, shape index: {}]
  %s4 = sld [smem:[#allocation0]]
  $region30: #{tpu_custom_call.1} parent=0
    _
  %s6 = ssub.s32 1, %s4
  %s7 = scalar_select 0, %s6, %s4
  $region1: #{tpu_custom_call.1} parent=0
    #allocation2 [shape = 'u8[24576]{0}', space=vmem, size = 0x6000, scoped, tag = 'input window, operand 0, single buffered']
    #allocation3 [shape = 's32[1]{0}', space=sflag, size = 0x4, scoped, tag = 'scoped memory for tpu_custom_call.1']
    #allocation4 [shape = 's32[1]{0}', space=sflag, size = 0x4, scoped, tag = 'scoped memory for tpu_custom_call.1']
    #allocation5 [shape = 'u8[196608]{0}', space=vmem, size = 0x30000, scoped, tag = 'input window, operand 1, single buffered']
    #allocation6 [shape = 's32[1]{0}', space=sflag, size = 0x4, scoped, tag = 'scoped memory for tpu_custom_call.1']
    #allocation7 [shape = 'u8[8192]{0}', space=vmem, size = 0x2000, scoped, tag = 'output window, operand 0, single buffered']
    %8 = vsyncpa [#allocation3], 0
    %9 = vsyncpa [#allocation6], 0
    %10 = vsyncpa [#allocation4], 0
    // Predicated region
    $region2: #{tpu_custom_call.1} parent=1 // pred_check
      _
    $region3: #{tpu_custom_call.1} parent=1 // pred_check_branch
      %12 = sbr.rel (0) target = $region5
    $region4: #{tpu_custom_call.1} parent=1 // pred_region
      %s14 = ssub.s32 768, 768
      %15 = vsyncadd [#allocation3], %s14
      %s16 = sshll.u32 [#allocation2], 4
      %s17 = int_to_ptr.vmem [resolvable:$true] %s16
      %22 = dma.hbm_to_vmem [thread:$0]  %s0, 768, %s17, [#allocation3], 384, 384, 24
    $region5: #{tpu_custom_call.1} parent=1 // pred_fallthru
      _
    // Predicated region
    $region6: #{tpu_custom_call.1} parent=1 // pred_check
      _
    $region7: #{tpu_custom_call.1} parent=1 // pred_check_branch
      %24 = sbr.rel (0) target = $region9
    $region8: #{tpu_custom_call.1} parent=1 // pred_region
      %s26 = ssub.s32 6144, 6144
      %27 = vsyncadd [#allocation6], %s26
      %s28 = sshll.u32 [#allocation5], 4
      %s29 = int_to_ptr.vmem [resolvable:$true] %s28
      %34 = dma.hbm_to_vmem [thread:$0]  %s1, 6144, %s29, [#allocation6], 128, 128, 8
    $region9: #{tpu_custom_call.1} parent=1 // pred_fallthru
      _
    // Predicated region
    $region10: #{tpu_custom_call.1} parent=1 // pred_check
      _
    $region11: #{tpu_custom_call.1} parent=1 // pred_check_branch
      %36 = sbr.rel (0) target = $region13
    $region12: #{tpu_custom_call.1} parent=1 // pred_region
      _
    $region13: #{tpu_custom_call.1} parent=1 // pred_fallthru
      _
    // Predicated region
    $region14: #{tpu_custom_call.1} parent=1 // pred_check
      _
    $region15: #{tpu_custom_call.1} parent=1 // pred_check_branch
      %38 = sbr.rel (0) target = $region17
    $region16: #{tpu_custom_call.1} parent=1 // pred_region
      %39 = dma.done [#allocation3], 768
    $region17: #{tpu_custom_call.1} parent=1 // pred_fallthru
      _
    // Predicated region
    $region18: #{tpu_custom_call.1} parent=1 // pred_check
      _
    $region19: #{tpu_custom_call.1} parent=1 // pred_check_branch
      %41 = sbr.rel (0) target = $region21
    $region20: #{tpu_custom_call.1} parent=1 // pred_region
      %42 = dma.done [#allocation6], 6144
    $region21: #{tpu_custom_call.1} parent=1 // pred_fallthru
      _
    %v43 = vld [vmem:[#allocation2] sm:$0xff]
    %v44 = vld [vmem:[#allocation2 + $0x8] sm:$0xff]
    %v45 = vld [vmem:[#allocation2 + $0x10] sm:$0xff]
    %v46 = vld [vmem:[#allocation2 + $0x18] sm:$0xff]
    %v47 = vld [vmem:[#allocation2 + $0x20] sm:$0xff]
    %v48 = vld [vmem:[#allocation2 + $0x28] sm:$0xff]
    %v49 = vld [vmem:[#allocation5] sm:$0xff]
    %v50 = vld [vmem:[#allocation5 + $0x8] sm:$0xff]
    %v51 = vld [vmem:[#allocation5 + $0x10] sm:$0xff]
    %v52 = vld [vmem:[#allocation5 + $0x18] sm:$0xff]
    %v53 = vld [vmem:[#allocation5 + $0x20] sm:$0xff]
    %v54 = vld [vmem:[#allocation5 + $0x28] sm:$0xff]
    %v55 = vld [vmem:[#allocation5 + $0x30] sm:$0xff]
    %v56 = vld [vmem:[#allocation5 + $0x38] sm:$0xff]
    %v57 = vld [vmem:[#allocation5 + $0x40] sm:$0xff]
    %v58 = vld [vmem:[#allocation5 + $0x48] sm:$0xff]
    %v59 = vld [vmem:[#allocation5 + $0x50] sm:$0xff]
    %v60 = vld [vmem:[#allocation5 + $0x58] sm:$0xff]
    %v61 = vld [vmem:[#allocation5 + $0x60] sm:$0xff]
    %v62 = vld [vmem:[#allocation5 + $0x68] sm:$0xff]
    %v63 = vld [vmem:[#allocation5 + $0x70] sm:$0xff]
    %v64 = vld [vmem:[#allocation5 + $0x78] sm:$0xff]
    %v65 = vld [vmem:[#allocation5 + $0x80] sm:$0xff]
    %v66 = vld [vmem:[#allocation5 + $0x88] sm:$0xff]
    %v67 = vld [vmem:[#allocation5 + $0x90] sm:$0xff]
    %v68 = vld [vmem:[#allocation5 + $0x98] sm:$0xff]
    %v69 = vld [vmem:[#allocation5 + $0xa0] sm:$0xff]
    %v70 = vld [vmem:[#allocation5 + $0xa8] sm:$0xff]
    %v71 = vld [vmem:[#allocation5 + $0xb0] sm:$0xff]
    %v72 = vld [vmem:[#allocation5 + $0xb8] sm:$0xff]
    %v73 = vld [vmem:[#allocation5 + $0xc0] sm:$0xff]
    %v74 = vld [vmem:[#allocation5 + $0xc8] sm:$0xff]
    %v75 = vld [vmem:[#allocation5 + $0xd0] sm:$0xff]
    %v76 = vld [vmem:[#allocation5 + $0xd8] sm:$0xff]
    %v77 = vld [vmem:[#allocation5 + $0xe0] sm:$0xff]
    %v78 = vld [vmem:[#allocation5 + $0xe8] sm:$0xff]
    %v79 = vld [vmem:[#allocation5 + $0xf0] sm:$0xff]
    %v80 = vld [vmem:[#allocation5 + $0xf8] sm:$0xff]
    %v81 = vld [vmem:[#allocation5 + $0x100] sm:$0xff]
    %v82 = vld [vmem:[#allocation5 + $0x108] sm:$0xff]
    %v83 = vld [vmem:[#allocation5 + $0x110] sm:$0xff]
    %v84 = vld [vmem:[#allocation5 + $0x118] sm:$0xff]
    %v85 = vld [vmem:[#allocation5 + $0x120] sm:$0xff]
    %v86 = vld [vmem:[#allocation5 + $0x128] sm:$0xff]
    %v87 = vld [vmem:[#allocation5 + $0x130] sm:$0xff]
    %v88 = vld [vmem:[#allocation5 + $0x138] sm:$0xff]
    %v89 = vld [vmem:[#allocation5 + $0x140] sm:$0xff]
    %v90 = vld [vmem:[#allocation5 + $0x148] sm:$0xff]
    %v91 = vld [vmem:[#allocation5 + $0x150] sm:$0xff]
    %v92 = vld [vmem:[#allocation5 + $0x158] sm:$0xff]
    %v93 = vld [vmem:[#allocation5 + $0x160] sm:$0xff]
    %v94 = vld [vmem:[#allocation5 + $0x168] sm:$0xff]
    %v95 = vld [vmem:[#allocation5 + $0x170] sm:$0xff]
    %v96 = vld [vmem:[#allocation5 + $0x178] sm:$0xff]
    %v97 = vld [vmem:[%s2] sm:$0x1]
    %v99 = vlaneseq
    %v100 = vshrl.u32 %v99, 7
    %v101 = vsub.s32 0, %v100
    %v102 = vrot.slane %v97, %v101
    %104 = vmatprep.subr.mxu0 0.0
    %105 = vmatpush1.msra.mxu0 %v49
    %106 = vmatprep.subr.mxu0 0.0
    %107 = vmatpush1.msra.mxu0 %v50
    %108 = vmatprep.subr.mxu0 0.0
    %109 = vmatpush1.msra.mxu0 %v51
    %110 = vmatprep.subr.mxu0 0.0
    %111 = vmatpush1.msra.mxu0 %v52
    %112 = vmatprep.subr.mxu0 0.0
    %113 = vmatpush1.msra.mxu0 %v53
    %114 = vmatprep.subr.mxu0 0.0
    %115 = vmatpush1.msra.mxu0 %v54
    %116 = vmatprep.subr.mxu0 0.0
    %117 = vmatpush1.msra.mxu0 %v55
    %118 = vmatprep.subr.mxu0 0.0
    %119 = vmatpush1.msra.mxu0 %v56
    %120 = vmatprep.subr.mxu0 0.0
    %121 = vmatpush1.msra.mxu0 %v57
    %122 = vmatprep.subr.mxu0 0.0
    %123 = vmatpush1.msra.mxu0 %v58
    %124 = vmatprep.subr.mxu0 0.0
    %125 = vmatpush1.msra.mxu0 %v59
    %126 = vmatprep.subr.mxu0 0.0
    %127 = vmatpush1.msra.mxu0 %v60
    %128 = vmatprep.subr.mxu0 0.0
    %129 = vmatpush1.msra.mxu0 %v61
    %130 = vmatprep.subr.mxu0 0.0
    %131 = vmatpush1.msra.mxu0 %v62
    %132 = vmatprep.subr.mxu0 0.0
    %133 = vmatpush1.msra.mxu0 %v63
    %134 = vmatprep.subr.mxu0 0.0
    %135 = vmatpush1.msra.mxu0 %v64
    %136 = vmatprep.subr.mxu0 0.0
    %137 = vmatpush1.msra.mxu0 %v65
    %138 = vmatprep.subr.mxu0 0.0
    %139 = vmatpush1.msra.mxu0 %v66
    %140 = vmatprep.subr.mxu0 0.0
    %141 = vmatpush1.msra.mxu0 %v67
    %142 = vmatprep.subr.mxu0 0.0
    %143 = vmatpush1.msra.mxu0 %v68
    %144 = vmatprep.subr.mxu0 0.0
    %145 = vmatpush1.msra.mxu0 %v69
    %146 = vmatprep.subr.mxu0 0.0
    %147 = vmatpush1.msra.mxu0 %v70
    %148 = vmatprep.subr.mxu0 0.0
    %149 = vmatpush1.msra.mxu0 %v71
    %150 = vmatprep.subr.mxu0 0.0
    %151 = vmatpush1.msra.mxu0 %v72
    %152 = vmatprep.subr.mxu0 0.0
    %153 = vmatpush1.msra.mxu0 %v73
    %154 = vmatprep.subr.mxu0 0.0
    %155 = vmatpush1.msra.mxu0 %v74
    %156 = vmatprep.subr.mxu0 0.0
    %157 = vmatpush1.msra.mxu0 %v75
    %158 = vmatprep.subr.mxu0 0.0
    %159 = vmatpush1.msra.mxu0 %v76
    %160 = vmatprep.subr.mxu0 0.0
    %161 = vmatpush1.msra.mxu0 %v77
    %162 = vmatprep.subr.mxu0 0.0
    %163 = vmatpush1.msra.mxu0 %v78
    %164 = vmatprep.subr.mxu0 0.0
    %165 = vmatpush1.msra.mxu0 %v79
    %166 = vmatprep.subr.mxu0 0.0
    %167 = vmatpush1.msra.mxu0 %v80
    %168 = vmatprep.mubr.f32.mxu0 %v44
    %169 = vmatmul.mubr.f32.gmra.mrb[0].mxu0 %v43
    %v170 = vpop.f32.mrb[0].mxu0
    %v171 = vadd.f32 %v102, %v170
    %v172 = vpop.f32.mrb[0].mxu0
    %173 = vmatprep.mubr.f32.mxu0 %v47
    %174 = vmatmul.mubr.f32.gmra.mrb[0].mxu0 %v46
    %v175 = vpop.f32.mrb[0].mxu0
    %v176 = vadd.f32 %v102, %v175
    %v177 = vpop.f32.mrb[0].mxu0
    %178 = vdwg.mxu0
    %179 = vmatprep.subr.mxu0 0.0
    %180 = vmatpush1.msra.mxu0 %v81
    %181 = vmatprep.subr.mxu0 0.0
    %182 = vmatpush1.msra.mxu0 %v82
    %183 = vmatprep.subr.mxu0 0.0
    %184 = vmatpush1.msra.mxu0 %v83
    %185 = vmatprep.subr.mxu0 0.0
    %186 = vmatpush1.msra.mxu0 %v84
    %187 = vmatprep.subr.mxu0 0.0
    %188 = vmatpush1.msra.mxu0 %v85
    %189 = vmatprep.subr.mxu0 0.0
    %190 = vmatpush1.msra.mxu0 %v86
    %191 = vmatprep.subr.mxu0 0.0
    %192 = vmatpush1.msra.mxu0 %v87
    %193 = vmatprep.subr.mxu0 0.0
    %194 = vmatpush1.msra.mxu0 %v88
    %195 = vmatprep.subr.mxu0 0.0
    %196 = vmatpush1.msra.mxu0 %v89
    %197 = vmatprep.subr.mxu0 0.0
    %198 = vmatpush1.msra.mxu0 %v90
    %199 = vmatprep.subr.mxu0 0.0
    %200 = vmatpush1.msra.mxu0 %v91
    %201 = vmatprep.subr.mxu0 0.0
    %202 = vmatpush1.msra.mxu0 %v92
    %203 = vmatprep.subr.mxu0 0.0
    %204 = vmatpush1.msra.mxu0 %v93
    %205 = vmatprep.subr.mxu0 0.0
    %206 = vmatpush1.msra.mxu0 %v94
    %207 = vmatprep.subr.mxu0 0.0
    %208 = vmatpush1.msra.mxu0 %v95
    %209 = vmatprep.subr.mxu0 0.0
    %210 = vmatpush1.msra.mxu0 %v96
    %211 = vmatprep.subr.mxu0 0.0
    %212 = vmatpush1.msra.mxu0 0.0
    %213 = vmatprep.subr.mxu0 0.0
    %214 = vmatpush1.msra.mxu0 0.0
    %215 = vmatprep.subr.mxu0 0.0
    %216 = vmatpush1.msra.mxu0 0.0
    %217 = vmatprep.subr.mxu0 0.0
    %218 = vmatpush1.msra.mxu0 0.0
    %219 = vmatprep.subr.mxu0 0.0
    %220 = vmatpush1.msra.mxu0 0.0
    %221 = vmatprep.subr.mxu0 0.0
    %222 = vmatpush1.msra.mxu0 0.0
    %223 = vmatprep.subr.mxu0 0.0
    %224 = vmatpush1.msra.mxu0 0.0
    %225 = vmatprep.subr.mxu0 0.0
    %226 = vmatpush1.msra.mxu0 0.0
    %227 = vmatprep.subr.mxu0 0.0
    %228 = vmatpush1.msra.mxu0 0.0
    %229 = vmatprep.subr.mxu0 0.0
    %230 = vmatpush1.msra.mxu0 0.0
    %231 = vmatprep.subr.mxu0 0.0
    %232 = vmatpush1.msra.mxu0 0.0
    %233 = vmatprep.subr.mxu0 0.0
    %234 = vmatpush1.msra.mxu0 0.0
    %235 = vmatprep.subr.mxu0 0.0
    %236 = vmatpush1.msra.mxu0 0.0
    %237 = vmatprep.subr.mxu0 0.0
    %238 = vmatpush1.msra.mxu0 0.0
    %239 = vmatprep.subr.mxu0 0.0
    %240 = vmatpush1.msra.mxu0 0.0
    %241 = vmatprep.subr.mxu0 0.0
    %242 = vmatpush1.msra.mxu0 0.0
    %243 = vmatprep.mubr.f32.mxu0 0.0
    %244 = vmatmul.mubr.f32.gmra.mrb[0].mxu0 %v45
    %v245 = vpop.f32.mrb[0].mxu0
    %v246 = vadd.f32 %v171, %v245
    %v247 = vpop.f32.mrb[0].mxu0
    %248 = vmatprep.mubr.f32.mxu0 0.0
    %249 = vmatmul.mubr.f32.gmra.mrb[0].mxu0 %v48
    %v250 = vpop.f32.mrb[0].mxu0
    %v251 = vadd.f32 %v176, %v250
    %v252 = vpop.f32.mrb[0].mxu0
    %253 = vdwg.mxu0
    %v254 = vmax.f32 %v246, 0.0
    %v255 = vmax.f32 %v251, 0.0
    %256 = vst [vmem:[#allocation7] sm:$0xff] %v254
    %257 = vst [vmem:[#allocation7 + $0x8] sm:$0xff] %v255
    // Predicated region
    $region22: #{tpu_custom_call.1} parent=1 // pred_check
      _
    $region23: #{tpu_custom_call.1} parent=1 // pred_check_branch
      %259 = sbr.rel (0) target = $region25
    $region24: #{tpu_custom_call.1} parent=1 // pred_region
      %s261 = ssub.s32 256, 256
      %262 = vsyncadd [#allocation4], %s261
      %s263 = sshll.u32 [#allocation7], 4
      %s264 = int_to_ptr.vmem [resolvable:$true] %s263
      %269 = dma.vmem_to_hbm [thread:$0]  %s264, 256, %s3, [#allocation4], 128, 128, 8
    $region25: #{tpu_custom_call.1} parent=1 // pred_fallthru
      _
    // Predicated region
    $region26: #{tpu_custom_call.1} parent=1 // pred_check
      _
    $region27: #{tpu_custom_call.1} parent=1 // pred_check_branch
      %271 = sbr.rel (0) target = $region29
    $region28: #{tpu_custom_call.1} parent=1 // pred_region
      %272 = dma.done [#allocation4], 256
    $region29: #{tpu_custom_call.1} parent=1 // pred_fallthru
      _
    %273 = vsyncpa [#allocation3], 1
    %274 = vsyncpa [#allocation6], 1
    %275 = vsyncpa [#allocation4], 1

</llo_original>
